<compile_context>
chip_gen: v5e
topology: v5e:2x2
jax: 0.10.0
libtpu: 0.0.40
codegen_flags: <defaults>
</compile_context>

<pallas_src>
import functools

import jax
import jax.numpy as jnp
from jax.experimental import pallas as pl
from jax.experimental.pallas import tpu as pltpu

# ---- module hyper-parameters (deterministic, from __init__ defaults) --------
ALPHA = 0.2
BETA = 0.6
LOW_THRESH = 0.2
HIGH_THRESH = 0.6
LAMBDA1 = 1.0
LAMBDA2 = 1.0
LAMBDA3 = 0.1

# ~1 MiB of f32 payload per grid step (N*C*TILE_HW elements).
_MAX_BLOCK_ELEMS = 256 * 1024


def _adaptive_curve_loss_kernel(x_ref, o_ref, *, hw, tile_hw, n, c):
    """One grid step: un-normalized partial sums for one spatial tile.

    x_ref : (N, C, TILE_HW) block of the flattened (N, C, H*W) input (VMEM).
    o_ref : (1, 3, 128) per-step partial-sum slot (VMEM):
            row 0 -> sum(low_mask  * |x - alpha|)
            row 1 -> sum(high_mask * |x - beta |)
            row 2 -> sum((x[:, 1:] - x[:, :-1]) ** 2)
    """
    j = pl.program_id(0)
    x = x_ref[...].astype(jnp.float32)  # upcast per tile (input may be bf16)

    # Lane-validity mask for a possibly-partial last spatial tile.
    if hw % tile_hw != 0:
        col = jax.lax.broadcasted_iota(jnp.int32, (n, 1, tile_hw), 2)
        valid = (col + j * tile_hw) < hw          # (N, 1, TILE_HW)
    else:
        valid = None

    # Masked-L1 terms.  When the threshold equals the target (the module's
    # defaults) the mask+abs collapses to a single relu-style max.
    if ALPHA == LOW_THRESH:
        low = jnp.maximum(LOW_THRESH - x, 0.0)
    else:
        low = jnp.where(x < LOW_THRESH, jnp.abs(x - ALPHA), 0.0)
    if BETA == HIGH_THRESH:
        high = jnp.maximum(x - HIGH_THRESH, 0.0)
    else:
        high = jnp.where(x > HIGH_THRESH, jnp.abs(x - BETA), 0.0)
    if valid is not None:
        low = jnp.where(valid, low, 0.0)
        high = jnp.where(valid, high, 0.0)
    low_s = jnp.sum(low)
    high_s = jnp.sum(high)

    # Smoothness term: differences along the channel axis (kept whole per
    # block, so no halo is needed).
    if c >= 2:
        d = x[:, 1:, :] - x[:, :-1, :]
        sq = d * d
        if valid is not None:
            sq = jnp.where(valid, sq, 0.0)
        smooth_s = jnp.sum(sq)
    else:
        smooth_s = jnp.float32(0.0)

    row = jax.lax.broadcasted_iota(jnp.int32, (3, 128), 0)
    o_ref[0] = jnp.where(row == 0, low_s,
                         jnp.where(row == 1, high_s, smooth_s))


def adaptive_curve_loss(output: jax.Array) -> jax.Array:
    """Pallas-backed equivalent of AdaptiveCurveLoss.forward(output)."""
    assert output.ndim == 4, "expected NCHW input"
    n, c, h, w = output.shape
    hw = h * w
    x = output.reshape(n, c, hw)  # free reshape; lane-dense last dim, no cast

    # Spatial tile size: multiple of 128 lanes, capped so one block stays
    # around _MAX_BLOCK_ELEMS elements; full-extent tile when H*W is small.
    tile_cap = max(128, (_MAX_BLOCK_ELEMS // max(n * c, 1)) // 128 * 128)
    tile_hw = hw if hw <= tile_cap else tile_cap
    num_tiles = pl.cdiv(hw, tile_hw)

    kernel = functools.partial(
        _adaptive_curve_loss_kernel, hw=hw, tile_hw=tile_hw, n=n, c=c)

    bytes_accessed = x.size * x.dtype.itemsize + num_tiles * 3 * 128 * 4
    cost = pl.CostEstimate(
        flops=8 * x.size, transcendentals=0, bytes_accessed=bytes_accessed)

    partials = pl.pallas_call(
        kernel,
        out_shape=jax.ShapeDtypeStruct((num_tiles, 3, 128), jnp.float32),
        grid=(num_tiles,),
        in_specs=[pl.BlockSpec((n, c, tile_hw), lambda j: (0, 0, j))],
        out_specs=pl.BlockSpec((1, 3, 128), lambda j: (j, 0, 0)),
        compiler_params=pltpu.CompilerParams(
            dimension_semantics=("parallel",),
            vmem_limit_bytes=32 * 1024 * 1024),
        cost_estimate=cost,
    )(x)

    # Tiny finalize in plain JAX: merge per-tile partials, normalize by the
    # true element counts, apply the lambda weights.
    sums = jnp.sum(partials[:, :, 0], axis=0)
    n_total = jnp.float32(n * c * hw)
    low_mean = sums[0] / n_total
    high_mean = sums[1] / n_total
    if c >= 2:
        smooth_mean = sums[2] / jnp.float32(n * (c - 1) * hw)
    else:
        smooth_mean = jnp.float32(jnp.nan)  # torch.mean over an empty tensor
    return LAMBDA1 * low_mean + LAMBDA2 * high_mean + LAMBDA3 * smooth_mean


def _reference_loss(output: jax.Array) -> jax.Array:
    """Pure-JAX reference mirroring the PyTorch module (for validation)."""
    x = output.astype(jnp.float32)
    low_mask = (x < LOW_THRESH).astype(jnp.float32)
    low_light_loss = jnp.mean(low_mask * jnp.abs(x - ALPHA))
    high_mask = (x > HIGH_THRESH).astype(jnp.float32)
    high_light_loss = jnp.mean(high_mask * jnp.abs(x - BETA))
    smooth_loss = jnp.mean((x[:, 1:] - x[:, :-1]) ** 2)
    return (LAMBDA1 * low_light_loss
            + LAMBDA2 * high_light_loss
            + LAMBDA3 * smooth_loss)


if __name__ == "__main__":
    key = jax.random.PRNGKey(0)
    # Small NCHW tensor; values in [0, 1] like an image/render output.
    x = jax.random.uniform(key, (2, 4, 16, 16), dtype=jnp.float32)

    loss = jax.block_until_ready(adaptive_curve_loss(x))
    ref = jax.block_until_ready(_reference_loss(x))
    assert jnp.allclose(loss, ref, rtol=1e-5, atol=1e-6), (loss, ref)

    print("KERNEL_OK")
</pallas_src>

<mosaic_0001>
module attributes {stable_mosaic.version = 11 : i64} {
  func.func @_adaptive_curve_loss_kernel(%arg0: i32, %arg1: memref<2x4x256xf32, #tpu.memory_space<vmem>>, %arg2: memref<1x3x128xf32, #tpu.memory_space<vmem>>) attributes {dimension_semantics = [#tpu.dimension_semantics<parallel>], iteration_bounds = array<i64: 1>, scalar_prefetch = 0 : i64, scratch_operands = 0 : i64, tpu.core_type = #tpu.core_type<tc>, window_params = [{transform_indices = @transform_0, window_bounds = array<i64: 2, 4, 256>}, {transform_indices = @transform_1, window_bounds = array<i64: 1, 3, 128>}]} {
    %c0 = arith.constant 0 : index
    %c0_0 = arith.constant 0 : index
    %c0_1 = arith.constant 0 : index
    %0 = vector.load %arg1[%c0, %c0_0, %c0_1] : memref<2x4x256xf32, #tpu.memory_space<vmem>>, vector<2x4x256xf32>
    %cst = arith.constant 2.000000e-01 : f32
    %1 = vector.broadcast %cst : f32 to vector<2x4x256xf32>
    %2 = arith.subf %1, %0 : vector<2x4x256xf32>
    %cst_2 = arith.constant 0.000000e+00 : f32
    %3 = vector.broadcast %cst_2 : f32 to vector<2x4x256xf32>
    %4 = arith.maximumf %2, %3 : vector<2x4x256xf32>
    %cst_3 = arith.constant 6.000000e-01 : f32
    %5 = vector.broadcast %cst_3 : f32 to vector<2x4x256xf32>
    %6 = arith.subf %0, %5 : vector<2x4x256xf32>
    %cst_4 = arith.constant 0.000000e+00 : f32
    %7 = vector.broadcast %cst_4 : f32 to vector<2x4x256xf32>
    %8 = arith.maximumf %6, %7 : vector<2x4x256xf32>
    %9 = vector.shape_cast %4 : vector<2x4x256xf32> to vector<1x2x4x256xf32>
    %cst_5 = arith.constant dense<0.000000e+00> : vector<1xf32>
    %10 = vector.multi_reduction <add>, %9, %cst_5 [1, 2, 3] : vector<1x2x4x256xf32> to vector<1xf32>
    %11 = vector.shape_cast %10 : vector<1xf32> to vector<1x1x1x1xf32>
    %12 = vector.extract %11[0, 0, 0, 0] : f32 from vector<1x1x1x1xf32>
    %13 = vector.shape_cast %8 : vector<2x4x256xf32> to vector<1x2x4x256xf32>
    %cst_6 = arith.constant dense<0.000000e+00> : vector<1xf32>
    %14 = vector.multi_reduction <add>, %13, %cst_6 [1, 2, 3] : vector<1x2x4x256xf32> to vector<1xf32>
    %15 = vector.shape_cast %14 : vector<1xf32> to vector<1x1x1x1xf32>
    %16 = vector.extract %15[0, 0, 0, 0] : f32 from vector<1x1x1x1xf32>
    %17 = vector.extract_strided_slice %0 {offsets = [0, 1, 0], sizes = [2, 3, 256], strides = [1, 1, 1]} : vector<2x4x256xf32> to vector<2x3x256xf32>
    %18 = vector.extract_strided_slice %0 {offsets = [0, 0, 0], sizes = [2, 3, 256], strides = [1, 1, 1]} : vector<2x4x256xf32> to vector<2x3x256xf32>
    %19 = arith.subf %17, %18 : vector<2x3x256xf32>
    %20 = arith.mulf %19, %19 : vector<2x3x256xf32>
    %21 = vector.shape_cast %20 : vector<2x3x256xf32> to vector<1x2x3x256xf32>
    %cst_7 = arith.constant dense<0.000000e+00> : vector<1xf32>
    %22 = vector.multi_reduction <add>, %21, %cst_7 [1, 2, 3] : vector<1x2x3x256xf32> to vector<1xf32>
    %23 = vector.shape_cast %22 : vector<1xf32> to vector<1x1x1x1xf32>
    %24 = vector.extract %23[0, 0, 0, 0] : f32 from vector<1x1x1x1xf32>
    %25 = tpu.iota {dimensions = array<i32: 0>} : vector<3x128xi32>
    %c0_i32 = arith.constant 0 : i32
    %26 = vector.broadcast %c0_i32 : i32 to vector<3x128xi32>
    %27 = arith.cmpi eq, %25, %26 : vector<3x128xi32>
    %c1_i32 = arith.constant 1 : i32
    %28 = vector.broadcast %c1_i32 : i32 to vector<3x128xi32>
    %29 = arith.cmpi eq, %25, %28 : vector<3x128xi32>
    %30 = vector.broadcast %16 : f32 to vector<3x128xf32>
    %31 = vector.broadcast %24 : f32 to vector<3x128xf32>
    %32 = arith.select %29, %30, %31 : vector<3x128xi1>, vector<3x128xf32>
    %33 = vector.broadcast %12 : f32 to vector<3x128xf32>
    %34 = arith.select %27, %33, %32 : vector<3x128xi1>, vector<3x128xf32>
    %c0_8 = arith.constant 0 : index
    %c0_9 = arith.constant 0 : index
    %c0_10 = arith.constant 0 : index
    %35 = vector.load %arg2[%c0_8, %c0_9, %c0_10] : memref<1x3x128xf32, #tpu.memory_space<vmem>>, vector<1x3x128xf32>
    %36 = vector.shape_cast %35 : vector<1x3x128xf32> to vector<3x128xf32>
    %37 = vector.shape_cast %34 : vector<3x128xf32> to vector<1x3x128xf32>
    tpu.vector_store %arg2[%c0_8, %c0_9, %c0_10], %37 {strides = array<i32>} : memref<1x3x128xf32, #tpu.memory_space<vmem>>, vector<1x3x128xf32>,
    return
  }
  func.func @transform_0(%arg0: i32) -> (i32, i32, i32) {
    %c0_i32 = arith.constant 0 : i32
    %c0_i32_0 = arith.constant 0 : i32
    %c0_i32_1 = arith.constant 0 : i32
    return %c0_i32, %c0_i32_0, %arg0 : i32, i32, i32
  }
  func.func @transform_1(%arg0: i32) -> (i32, i32, i32) {
    %c0_i32 = arith.constant 0 : i32
    %c0_i32_0 = arith.constant 0 : i32
    %c0_i32_1 = arith.constant 0 : i32
    return %arg0, %c0_i32, %c0_i32_0 : i32, i32, i32
  }
}

</mosaic_0001>

<llo_original>
// kernel: tpu_custom_call.1
$region0: #{tpu_custom_call.1}
  #allocation0 [shape = 'u32[]', space=smem, size = 0x4, offset = 0x4, fixed_abs, tag = 'smem constant byte address 0x4 - core index']
  #allocation1 [shape = 'u32[72,128]{1,0:T(1,128)}', space=vmem, size = 0x9000, scoped, tag = 'internal scratch']
  %s0 = inlined_call_operand.hbm [shape: f32[2,4,256], index: 0, kind: input, shape index: {}]
  %s1 = inlined_call_operand.vmem [shape: f32[1,3,128], index: 1, kind: output, shape index: {}]
  %s2 = sld [smem:[#allocation0]]
  $region18: #{tpu_custom_call.1} parent=0
    _
  %s4 = ssub.s32 1, %s2
  %s5 = scalar_select 0, %s4, %s2
  $region1: #{tpu_custom_call.1} parent=0
    #allocation2 [shape = 'u8[8192]{0}', space=vmem, size = 0x2000, scoped, tag = 'input window, operand 0, single buffered']
    #allocation3 [shape = 's32[1]{0}', space=sflag, size = 0x4, scoped, tag = 'scoped memory for tpu_custom_call.1']
    %6 = vsyncpa [#allocation3], 0
    // Predicated region
    $region2: #{tpu_custom_call.1} parent=1 // pred_check
      _
    $region3: #{tpu_custom_call.1} parent=1 // pred_check_branch
      %8 = sbr.rel (0) target = $region5
    $region4: #{tpu_custom_call.1} parent=1 // pred_region
      %10 = vsyncadd [#allocation3], 0
      %s11 = sshll.u32 %s0, 4
      %s12 = int_to_ptr.hbm [resolvable:$true] %s11
      %s13 = sshll.u32 [#allocation2], 4
      %s14 = int_to_ptr.vmem [resolvable:$true] %s13
      %19 = dma.hbm_to_vmem [thread:$0]  %s12, 256, %s14, [#allocation3], 128, 128, 8
    $region5: #{tpu_custom_call.1} parent=1 // pred_fallthru
      _
    // Predicated region
    $region6: #{tpu_custom_call.1} parent=1 // pred_check
      _
    $region7: #{tpu_custom_call.1} parent=1 // pred_check_branch
      %21 = sbr.rel (0) target = $region9
    $region8: #{tpu_custom_call.1} parent=1 // pred_region
      %23 = dma.done [#allocation3], 256
    $region9: #{tpu_custom_call.1} parent=1 // pred_fallthru
      _
    %v24 = vld [vmem:[#allocation2] sm:$0xff]
    %v25 = vld [vmem:[#allocation2 + $0x8] sm:$0xff]
    %v26 = vsub.f32 0.2, %v24
    %v27 = vsub.f32 0.2, %v25
    %v28 = vmax.f32 %v26, 0.0
    %v29 = vmax.f32 %v27, 0.0
    %v30 = vsub.f32 %v24, 0.6
    %v31 = vsub.f32 %v25, 0.6
    %v32 = vmax.f32 %v30, 0.0
    %v33 = vmax.f32 %v31, 0.0
    %36 = vst [vmem:[#allocation1] ss:$2 sm:$0xff] %v28
    %v37 = vld.sshfl [vmem:[#allocation1] sm:$0xff pattern:$0x75316420]
    %v38 = vld.sshfl [vmem:[#allocation1 + $0x8] sm:$0xff pattern:$0x75316420]
    %s39 = scalar_lea.vmem [#allocation1], 16
    %40 = vst [vmem:[%s39] ss:$2 sm:$0xff] %v29
    %v41 = vld.sshfl [vmem:[#allocation1 + $0x10] sm:$0xff pattern:$0x75316420]
    %v42 = vld.sshfl [vmem:[#allocation1 + $0x18] sm:$0xff pattern:$0x75316420]
    %vm47 = vcmask 1043456
    %v48 = vsel %vm47, %v37, 0.0
    %v49 = vsel %vm47, %v38, 0.0
    %v50 = vadd.f32 %v48, %v49
    %v51 = vsel %vm47, %v41, 0.0
    %v52 = vadd.f32 %v50, %v51
    %v53 = vsel %vm47, %v42, 0.0
    %v54 = vadd.f32 %v52, %v53
    %55 = vadd.xlane.f32.xlu0 %v54
    %v56 = vpop.xlane.xlu0 %55
    %v57 = vrot.slane %v56, 4
    %v58 = vadd.f32 %v56, %v57
    %v59 = vrot.slane %v58, 2
    %v60 = vadd.f32 %v58, %v59
    %v61 = vrot.slane %v60, 1
    %v62 = vadd.f32 %v60, %v61
    %s63 = vtos %v62
    %66 = vst [vmem:[#allocation1] ss:$2 sm:$0xff] %v32
    %v67 = vld.sshfl [vmem:[#allocation1] sm:$0xff pattern:$0x75316420]
    %v68 = vld.sshfl [vmem:[#allocation1 + $0x8] sm:$0xff pattern:$0x75316420]
    %s69 = scalar_lea.vmem [#allocation1], 16
    %70 = vst [vmem:[%s69] ss:$2 sm:$0xff] %v33
    %v71 = vld.sshfl [vmem:[#allocation1 + $0x10] sm:$0xff pattern:$0x75316420]
    %v72 = vld.sshfl [vmem:[#allocation1 + $0x18] sm:$0xff pattern:$0x75316420]
    %v77 = vsel %vm47, %v67, 0.0
    %v78 = vsel %vm47, %v68, 0.0
    %v79 = vadd.f32 %v77, %v78
    %v80 = vsel %vm47, %v71, 0.0
    %v81 = vadd.f32 %v79, %v80
    %v82 = vsel %vm47, %v72, 0.0
    %v83 = vadd.f32 %v81, %v82
    %84 = vadd.xlane.f32.xlu0 %v83
    %v85 = vpop.xlane.xlu0 %84
    %v86 = vrot.slane %v85, 4
    %v87 = vadd.f32 %v85, %v86
    %v88 = vrot.slane %v87, 2
    %v89 = vadd.f32 %v87, %v88
    %v90 = vrot.slane %v89, 1
    %v91 = vadd.f32 %v89, %v90
    %s92 = vtos %v91
    %v95 = vrot.slane %v24, 7
    %v96 = vrot.slane %v25, 7
    %v99 = vsub.f32 %v24, %v95
    %v100 = vsub.f32 %v25, %v96
    %v101 = vmul.f32 %v99, %v99
    %v102 = vmul.f32 %v100, %v100
    %105 = vst [vmem:[#allocation1] ss:$2 sm:$0xff] %v101
    %v106 = vld.sshfl [vmem:[#allocation1] sm:$0xff pattern:$0x75316420]
    %v107 = vld.sshfl [vmem:[#allocation1 + $0x8] sm:$0xff pattern:$0x75316420]
    %s108 = scalar_lea.vmem [#allocation1], 16
    %109 = vst [vmem:[%s108] ss:$2 sm:$0xff] %v102
    %v110 = vld.sshfl [vmem:[#allocation1 + $0x10] sm:$0xff pattern:$0x75316420]
    %v111 = vld.sshfl [vmem:[#allocation1 + $0x18] sm:$0xff pattern:$0x75316420]
    %v112 = vrot.slane %v106, 1
    %v113 = vrot.slane %v107, 1
    %v114 = vrot.slane %v110, 1
    %v115 = vrot.slane %v111, 1
    %vm120 = vcmask 1042432
    %v121 = vsel %vm120, %v112, 0.0
    %v122 = vsel %vm120, %v113, 0.0
    %v123 = vadd.f32 %v121, %v122
    %v124 = vsel %vm120, %v114, 0.0
    %v125 = vadd.f32 %v123, %v124
    %v126 = vsel %vm120, %v115, 0.0
    %v127 = vadd.f32 %v125, %v126
    %128 = vadd.xlane.f32.xlu0 %v127
    %v129 = vpop.xlane.xlu0 %128
    %v130 = vrot.slane %v129, 4
    %v131 = vadd.f32 %v129, %v130
    %v132 = vrot.slane %v131, 2
    %v133 = vadd.f32 %v131, %v132
    %v134 = vrot.slane %v133, 1
    %v135 = vadd.f32 %v133, %v134
    %s136 = vtos %v135
    %v137 = vlaneseq
    %v138 = vshrl.u32 %v137, 7
    %vm139 = vcmp.eq.s32.totalorder %v138, 0
    %vm140 = vcmp.eq.s32.totalorder %v138, 1
    %v141 = vstv %s92
    %v142 = vstv %s136
    %v143 = vsel %vm140, %v141, %v142
    %v144 = vstv %s63
    %v145 = vsel %vm139, %v144, %v143
    %146 = vst [vmem:[%s1] sm:$0x7] %v145
    // Predicated region
    $region10: #{tpu_custom_call.1} parent=1 // pred_check
      _
    $region11: #{tpu_custom_call.1} parent=1 // pred_check_branch
      %148 = sbr.rel (0) target = $region13
    $region12: #{tpu_custom_call.1} parent=1 // pred_region
      _
    $region13: #{tpu_custom_call.1} parent=1 // pred_fallthru
      _
    // Predicated region
    $region14: #{tpu_custom_call.1} parent=1 // pred_check
      _
    $region15: #{tpu_custom_call.1} parent=1 // pred_check_branch
      %150 = sbr.rel (0) target = $region17
    $region16: #{tpu_custom_call.1} parent=1 // pred_region
      _
    $region17: #{tpu_custom_call.1} parent=1 // pred_fallthru
      _
    %151 = vsyncpa [#allocation3], 1

</llo_original>
